<compile_context>
chip_gen: v7x
topology: tpu7x:2x2x1
jax: 0.10.0
libtpu: 0.0.40
codegen_flags: <defaults>
</compile_context>

<pallas_src>
import functools

import jax
import jax.numpy as jnp
from jax import lax
from jax.experimental import pallas as pl
from jax.experimental.pallas import tpu as pltpu


def _dwpw_kernel(xb_ref, xh_ref, wdw_ref, wpw_ref, bpw_ref, o_ref, band_ref,
                 *, K, TH, W_out):
    # xb_ref : (1, TH,  Wp, Cin)   body rows [t*TH, t*TH+TH) of the padded input
    # xh_ref : (1, G,   Wp, Cin)   halo rows; only the first K-1 are used
    # wdw_ref: (K*K, 1, Cin)       per-tap depthwise scales (lane-major on Cin)
    # wpw_ref: (Cin, Cout)         pointwise (1x1) weights
    # bpw_ref: (1, Cout)           folded bias: b_pw + b_dw @ wpw
    # o_ref  : (1, TH, W_out, Cout)
    # band_ref: VMEM scratch (TH + K - 1, Wp, Cin)
    Cin = xb_ref.shape[-1]
    Cout = o_ref.shape[-1]
    Wp = xb_ref.shape[2]

    # Assemble the (TH + K - 1)-row input band for this output tile.
    band_ref[pl.ds(0, TH)] = xb_ref[0]
    band_ref[pl.ds(TH, K - 1)] = xh_ref[0, 0:K - 1]
    band = band_ref[...]                       # (TH + K - 1, Wp, Cin)

    # Depthwise KxK conv: K rolls along W (sublane axis, XLU), each reused
    # across the ki taps; the ki shifts are free leading-dim slices.
    acc = jnp.zeros((TH, W_out, Cin), jnp.float32)
    for kj in range(K):
        if kj == 0:
            shifted = band
        else:
            # roll so that shifted[:, w, :] == band[:, w + kj, :] for w < W_out
            shifted = pltpu.roll(band, shift=Wp - kj, axis=1)
        shifted = shifted[:, :W_out, :].astype(jnp.float32)
        for ki in range(K):
            acc = acc + shifted[ki:ki + TH] * wdw_ref[ki * K + kj]

    # Pointwise 1x1 conv == matmul over channels (f32 accumulate on the MXU).
    y = acc.reshape(TH * W_out, Cin)
    out = jnp.dot(y, wpw_ref[...], preferred_element_type=jnp.float32)
    out = out + bpw_ref[...]
    o_ref[0] = out.reshape(TH, W_out, Cout).astype(o_ref.dtype)


def _pick_tile_h(H_out, W_out, K):
    """Pick TH | H_out, preferring TH % (K-1) == 0 and TH*W_out >= 128."""
    divs = [d for d in range(1, H_out + 1) if H_out % d == 0]
    cands = [d for d in divs if K <= 1 or d % (K - 1) == 0] or divs
    target = max(8, -(-128 // max(W_out, 1)))
    ok = [d for d in cands if target <= d <= 64]
    if ok:
        return min(ok)
    small = [d for d in cands if d <= 64]
    return max(small) if small else min(cands)


def depthwise_conv2d_pallas(x_nchw, w_dw, b_dw, w_pw, b_pw,
                            *, kernel_size, padding, stride=1):
    """x_nchw: (N, Cin, H, W); returns (N, Cout, H_out, W_out) like PyTorch."""
    N, Cin, H, W = x_nchw.shape
    Cout = w_pw.shape[0]
    K = kernel_size
    if stride != 1:
        # TODO(synk): strided depthwise path needs strided lane slicing; only stride=1 is implemented.
        raise NotImplementedError("stride != 1 not supported by the Pallas path")
    if K < 2:
        # TODO(synk): K == 1 degenerates the halo stream; handle separately if ever needed.
        raise NotImplementedError("kernel_size >= 2 required")

    H_out = H + 2 * padding - K + 1
    W_out = W + 2 * padding - K + 1

    TH = _pick_tile_h(H_out, W_out, K)
    T = H_out // TH
    # Halo block size G: K-1 when it divides TH (exact, no extra traffic),
    # otherwise fall back to a full TH-row halo (with a little extra bottom pad).
    G = (K - 1) if TH % (K - 1) == 0 else TH

    # Padded NHWC input: W rounded up to a multiple of 8 (sublane-aligned rolls
    # and layout-no-op reshapes); H padded enough for the halo stream.
    Hp = max(H + 2 * padding, H_out + G)
    Wp = ((W + 2 * padding + 7) // 8) * 8
    x_nhwc = jnp.transpose(x_nchw, (0, 2, 3, 1))
    xp = jnp.pad(x_nhwc, ((0, 0),
                          (padding, Hp - H - padding),
                          (padding, Wp - W - padding),
                          (0, 0)))

    # Weight prep (torch layouts -> kernel layouts) + bias folding.
    wdw = jnp.transpose(w_dw[:, 0, :, :], (1, 2, 0)).reshape(K * K, 1, Cin)
    wpw = jnp.transpose(w_pw[:, :, 0, 0], (1, 0))          # (Cin, Cout)
    bpw = (b_pw + b_dw @ wpw).reshape(1, Cout)              # folded dw bias

    kernel = functools.partial(_dwpw_kernel, K=K, TH=TH, W_out=W_out)

    # Explicit VMEM budget from the actual per-step working set (+ headroom).
    itemsize = jnp.dtype(x_nchw.dtype).itemsize
    est_bytes = (2 * (TH + G) * Wp * Cin          # double-buffered body + halo
                 + 2 * TH * W_out * Cout          # double-buffered output
                 + (TH + K - 1) * Wp * Cin        # band scratch
                 + 2 * (K * K * Cin + Cin * Cout + Cout)) * itemsize
    vmem_limit = int(min(64 * 2**20, max(8 * 2**20, 4 * est_bytes)))

    out_nhwc = pl.pallas_call(
        kernel,
        out_shape=jax.ShapeDtypeStruct((N, H_out, W_out, Cout), x_nchw.dtype),
        grid_spec=pltpu.PrefetchScalarGridSpec(
            num_scalar_prefetch=0,
            grid=(N, T),
            in_specs=[
                # body rows of the padded image for output tile t
                pl.BlockSpec((1, TH, Wp, Cin), lambda n, t: (n, t, 0, 0)),
                # halo rows just below the body tile (same array, 2nd stream)
                pl.BlockSpec((1, G, Wp, Cin),
                             lambda n, t: (n, (t + 1) * (TH // G), 0, 0)),
                pl.BlockSpec((K * K, 1, Cin), lambda n, t: (0, 0, 0)),
                pl.BlockSpec((Cin, Cout), lambda n, t: (0, 0)),
                pl.BlockSpec((1, Cout), lambda n, t: (0, 0)),
            ],
            out_specs=pl.BlockSpec((1, TH, W_out, Cout),
                                   lambda n, t: (n, t, 0, 0)),
            scratch_shapes=[pltpu.VMEM((TH + K - 1, Wp, Cin), x_nchw.dtype)],
        ),
        compiler_params=pltpu.CompilerParams(
            dimension_semantics=("parallel", "parallel"),
            vmem_limit_bytes=vmem_limit),
    )(xp, xp, wdw, wpw, bpw)

    # NHWC -> NCHW to match the PyTorch output convention.
    return jnp.transpose(out_nhwc, (0, 3, 1, 2))


def _reference(x, w_dw, b_dw, w_pw, b_pw, *, padding, stride):
    # Pure-JAX reference matching torch semantics exactly (NCHW / OIHW).
    Cin = x.shape[1]
    y = lax.conv_general_dilated(
        x, w_dw, (stride, stride), [(padding, padding), (padding, padding)],
        dimension_numbers=("NCHW", "OIHW", "NCHW"), feature_group_count=Cin)
    y = y + b_dw[None, :, None, None]
    z = lax.conv_general_dilated(
        y, w_pw, (1, 1), "VALID",
        dimension_numbers=("NCHW", "OIHW", "NCHW"))
    return z + b_pw[None, :, None, None]


if __name__ == "__main__":
    # Module config (consistent with DepthWiseConv2d(dim_in, dim_out, k, p)):
    dim_in, dim_out = 4, 8
    kernel_size, padding, stride = 3, 1, 1
    N, H, W = 2, 16, 16

    key = jax.random.PRNGKey(0)
    k_x, k_wdw, k_bdw, k_wpw, k_bpw = jax.random.split(key, 5)

    x = jax.random.normal(k_x, (N, dim_in, H, W), jnp.float32)
    # Parameter shapes follow nn.Conv2d:
    #   depthwise: weight (dim_in, 1, K, K), bias (dim_in,)  [groups=dim_in]
    #   pointwise: weight (dim_out, dim_in, 1, 1), bias (dim_out,)
    w_dw = jax.random.normal(k_wdw, (dim_in, 1, kernel_size, kernel_size),
                             jnp.float32) * 0.1
    b_dw = jax.random.normal(k_bdw, (dim_in,), jnp.float32) * 0.1
    w_pw = jax.random.normal(k_wpw, (dim_out, dim_in, 1, 1), jnp.float32) * 0.1
    b_pw = jax.random.normal(k_bpw, (dim_out,), jnp.float32) * 0.1

    out = depthwise_conv2d_pallas(x, w_dw, b_dw, w_pw, b_pw,
                                  kernel_size=kernel_size,
                                  padding=padding, stride=stride)
    out = jax.block_until_ready(out)

    ref = _reference(x, w_dw, b_dw, w_pw, b_pw, padding=padding, stride=stride)
    ref = jax.block_until_ready(ref)

    assert out.shape == ref.shape == (N, dim_out, H, W), (out.shape, ref.shape)
    assert jnp.allclose(out, ref, atol=1e-5, rtol=1e-5), \
        float(jnp.max(jnp.abs(out - ref)))

    print("KERNEL_OK")
</pallas_src>

<mosaic_0001>
module attributes {stable_mosaic.version = 11 : i64} {
  func.func @_dwpw_kernel(%arg0: i32, %arg1: i32, %arg2: memref<1x8x24x4xf32, #tpu.memory_space<vmem>>, %arg3: memref<1x2x24x4xf32, #tpu.memory_space<vmem>>, %arg4: memref<9x1x4xf32, #tpu.memory_space<vmem>>, %arg5: memref<4x8xf32, #tpu.memory_space<vmem>>, %arg6: memref<1x8xf32, #tpu.memory_space<vmem>>, %arg7: memref<1x8x16x8xf32, #tpu.memory_space<vmem>>, %arg8: memref<10x24x4xf32, #tpu.memory_space<vmem>>) attributes {dimension_semantics = [#tpu.dimension_semantics<parallel>, #tpu.dimension_semantics<parallel>], iteration_bounds = array<i64: 2, 2>, scalar_prefetch = 0 : i64, scratch_operands = 1 : i64, tpu.core_type = #tpu.core_type<tc>, window_params = [{transform_indices = @transform_0, window_bounds = array<i64: 1, 8, 24, 4>}, {transform_indices = @transform_1, window_bounds = array<i64: 1, 2, 24, 4>}, {pipeline_mode = #tpu.pipeline_mode<synchronous>, transform_indices = @transform_2, window_bounds = array<i64: 9, 1, 4>}, {pipeline_mode = #tpu.pipeline_mode<synchronous>, transform_indices = @transform_3, window_bounds = array<i64: 4, 8>}, {pipeline_mode = #tpu.pipeline_mode<synchronous>, transform_indices = @transform_4, window_bounds = array<i64: 1, 8>}, {transform_indices = @transform_5, window_bounds = array<i64: 1, 8, 16, 8>}]} {
    %c0 = arith.constant 0 : index
    %c0_0 = arith.constant 0 : index
    %c0_1 = arith.constant 0 : index
    %c0_2 = arith.constant 0 : index
    %0 = vector.load %arg2[%c0, %c0_0, %c0_1, %c0_2] : memref<1x8x24x4xf32, #tpu.memory_space<vmem>>, vector<1x8x24x4xf32>
    %1 = vector.shape_cast %0 : vector<1x8x24x4xf32> to vector<8x24x4xf32>
    %c0_3 = arith.constant 0 : index
    %c0_4 = arith.constant 0 : index
    %c0_5 = arith.constant 0 : index
    %2 = vector.load %arg8[%c0_3, %c0_4, %c0_5] : memref<10x24x4xf32, #tpu.memory_space<vmem>>, vector<8x24x4xf32>
    tpu.vector_store %arg8[%c0_3, %c0_4, %c0_5], %1 {strides = array<i32>} : memref<10x24x4xf32, #tpu.memory_space<vmem>>, vector<8x24x4xf32>,
    %c0_6 = arith.constant 0 : index
    %c0_7 = arith.constant 0 : index
    %c0_8 = arith.constant 0 : index
    %c0_9 = arith.constant 0 : index
    %3 = vector.load %arg3[%c0_6, %c0_7, %c0_8, %c0_9] : memref<1x2x24x4xf32, #tpu.memory_space<vmem>>, vector<1x2x24x4xf32>
    %4 = vector.shape_cast %3 : vector<1x2x24x4xf32> to vector<2x24x4xf32>
    %c8 = arith.constant 8 : index
    %c0_10 = arith.constant 0 : index
    %c0_11 = arith.constant 0 : index
    %5 = vector.load %arg8[%c8, %c0_10, %c0_11] : memref<10x24x4xf32, #tpu.memory_space<vmem>>, vector<2x24x4xf32>
    tpu.vector_store %arg8[%c8, %c0_10, %c0_11], %4 {strides = array<i32>} : memref<10x24x4xf32, #tpu.memory_space<vmem>>, vector<2x24x4xf32>,
    %c0_12 = arith.constant 0 : index
    %c0_13 = arith.constant 0 : index
    %c0_14 = arith.constant 0 : index
    %6 = vector.load %arg8[%c0_12, %c0_13, %c0_14] : memref<10x24x4xf32, #tpu.memory_space<vmem>>, vector<10x24x4xf32>
    %cst = arith.constant 0.000000e+00 : f32
    %7 = vector.broadcast %cst : f32 to vector<8x16x4xf32>
    %8 = vector.extract_strided_slice %6 {offsets = [0, 0, 0], sizes = [10, 16, 4], strides = [1, 1, 1]} : vector<10x24x4xf32> to vector<10x16x4xf32>
    %9 = vector.extract_strided_slice %8 {offsets = [0, 0, 0], sizes = [8, 16, 4], strides = [1, 1, 1]} : vector<10x16x4xf32> to vector<8x16x4xf32>
    %c0_15 = arith.constant 0 : index
    %c0_16 = arith.constant 0 : index
    %c0_17 = arith.constant 0 : index
    %10 = vector.load %arg4[%c0_15, %c0_16, %c0_17] : memref<9x1x4xf32, #tpu.memory_space<vmem>>, vector<1x1x4xf32>
    %11 = vector.shape_cast %10 : vector<1x1x4xf32> to vector<1x4xf32>
    %12 = vector.shape_cast %11 : vector<1x4xf32> to vector<1x1x4xf32>
    %13 = vector.broadcast %12 : vector<1x1x4xf32> to vector<8x16x4xf32>
    %14 = arith.mulf %9, %13 : vector<8x16x4xf32>
    %15 = arith.addf %7, %14 : vector<8x16x4xf32>
    %16 = vector.extract_strided_slice %8 {offsets = [1, 0, 0], sizes = [8, 16, 4], strides = [1, 1, 1]} : vector<10x16x4xf32> to vector<8x16x4xf32>
    %c3 = arith.constant 3 : index
    %c0_18 = arith.constant 0 : index
    %c0_19 = arith.constant 0 : index
    %17 = vector.load %arg4[%c3, %c0_18, %c0_19] : memref<9x1x4xf32, #tpu.memory_space<vmem>>, vector<1x1x4xf32>
    %18 = vector.shape_cast %17 : vector<1x1x4xf32> to vector<1x4xf32>
    %19 = vector.shape_cast %18 : vector<1x4xf32> to vector<1x1x4xf32>
    %20 = vector.broadcast %19 : vector<1x1x4xf32> to vector<8x16x4xf32>
    %21 = arith.mulf %16, %20 : vector<8x16x4xf32>
    %22 = arith.addf %15, %21 : vector<8x16x4xf32>
    %23 = vector.extract_strided_slice %8 {offsets = [2, 0, 0], sizes = [8, 16, 4], strides = [1, 1, 1]} : vector<10x16x4xf32> to vector<8x16x4xf32>
    %c6 = arith.constant 6 : index
    %c0_20 = arith.constant 0 : index
    %c0_21 = arith.constant 0 : index
    %24 = vector.load %arg4[%c6, %c0_20, %c0_21] : memref<9x1x4xf32, #tpu.memory_space<vmem>>, vector<1x1x4xf32>
    %25 = vector.shape_cast %24 : vector<1x1x4xf32> to vector<1x4xf32>
    %26 = vector.shape_cast %25 : vector<1x4xf32> to vector<1x1x4xf32>
    %27 = vector.broadcast %26 : vector<1x1x4xf32> to vector<8x16x4xf32>
    %28 = arith.mulf %23, %27 : vector<8x16x4xf32>
    %29 = arith.addf %22, %28 : vector<8x16x4xf32>
    %c23_i32 = arith.constant 23 : i32
    %30 = tpu.dynamic_rotate %6 by %c23_i32 dim 1 : vector<10x24x4xf32>, i32 -> vector<10x24x4xf32>
    %31 = vector.extract_strided_slice %30 {offsets = [0, 0, 0], sizes = [10, 16, 4], strides = [1, 1, 1]} : vector<10x24x4xf32> to vector<10x16x4xf32>
    %32 = vector.extract_strided_slice %31 {offsets = [0, 0, 0], sizes = [8, 16, 4], strides = [1, 1, 1]} : vector<10x16x4xf32> to vector<8x16x4xf32>
    %c1 = arith.constant 1 : index
    %c0_22 = arith.constant 0 : index
    %c0_23 = arith.constant 0 : index
    %33 = vector.load %arg4[%c1, %c0_22, %c0_23] : memref<9x1x4xf32, #tpu.memory_space<vmem>>, vector<1x1x4xf32>
    %34 = vector.shape_cast %33 : vector<1x1x4xf32> to vector<1x4xf32>
    %35 = vector.shape_cast %34 : vector<1x4xf32> to vector<1x1x4xf32>
    %36 = vector.broadcast %35 : vector<1x1x4xf32> to vector<8x16x4xf32>
    %37 = arith.mulf %32, %36 : vector<8x16x4xf32>
    %38 = arith.addf %29, %37 : vector<8x16x4xf32>
    %39 = vector.extract_strided_slice %31 {offsets = [1, 0, 0], sizes = [8, 16, 4], strides = [1, 1, 1]} : vector<10x16x4xf32> to vector<8x16x4xf32>
    %c4 = arith.constant 4 : index
    %c0_24 = arith.constant 0 : index
    %c0_25 = arith.constant 0 : index
    %40 = vector.load %arg4[%c4, %c0_24, %c0_25] : memref<9x1x4xf32, #tpu.memory_space<vmem>>, vector<1x1x4xf32>
    %41 = vector.shape_cast %40 : vector<1x1x4xf32> to vector<1x4xf32>
    %42 = vector.shape_cast %41 : vector<1x4xf32> to vector<1x1x4xf32>
    %43 = vector.broadcast %42 : vector<1x1x4xf32> to vector<8x16x4xf32>
    %44 = arith.mulf %39, %43 : vector<8x16x4xf32>
    %45 = arith.addf %38, %44 : vector<8x16x4xf32>
    %46 = vector.extract_strided_slice %31 {offsets = [2, 0, 0], sizes = [8, 16, 4], strides = [1, 1, 1]} : vector<10x16x4xf32> to vector<8x16x4xf32>
    %c7 = arith.constant 7 : index
    %c0_26 = arith.constant 0 : index
    %c0_27 = arith.constant 0 : index
    %47 = vector.load %arg4[%c7, %c0_26, %c0_27] : memref<9x1x4xf32, #tpu.memory_space<vmem>>, vector<1x1x4xf32>
    %48 = vector.shape_cast %47 : vector<1x1x4xf32> to vector<1x4xf32>
    %49 = vector.shape_cast %48 : vector<1x4xf32> to vector<1x1x4xf32>
    %50 = vector.broadcast %49 : vector<1x1x4xf32> to vector<8x16x4xf32>
    %51 = arith.mulf %46, %50 : vector<8x16x4xf32>
    %52 = arith.addf %45, %51 : vector<8x16x4xf32>
    %c22_i32 = arith.constant 22 : i32
    %53 = tpu.dynamic_rotate %6 by %c22_i32 dim 1 : vector<10x24x4xf32>, i32 -> vector<10x24x4xf32>
    %54 = vector.extract_strided_slice %53 {offsets = [0, 0, 0], sizes = [10, 16, 4], strides = [1, 1, 1]} : vector<10x24x4xf32> to vector<10x16x4xf32>
    %55 = vector.extract_strided_slice %54 {offsets = [0, 0, 0], sizes = [8, 16, 4], strides = [1, 1, 1]} : vector<10x16x4xf32> to vector<8x16x4xf32>
    %c2 = arith.constant 2 : index
    %c0_28 = arith.constant 0 : index
    %c0_29 = arith.constant 0 : index
    %56 = vector.load %arg4[%c2, %c0_28, %c0_29] : memref<9x1x4xf32, #tpu.memory_space<vmem>>, vector<1x1x4xf32>
    %57 = vector.shape_cast %56 : vector<1x1x4xf32> to vector<1x4xf32>
    %58 = vector.shape_cast %57 : vector<1x4xf32> to vector<1x1x4xf32>
    %59 = vector.broadcast %58 : vector<1x1x4xf32> to vector<8x16x4xf32>
    %60 = arith.mulf %55, %59 : vector<8x16x4xf32>
    %61 = arith.addf %52, %60 : vector<8x16x4xf32>
    %62 = vector.extract_strided_slice %54 {offsets = [1, 0, 0], sizes = [8, 16, 4], strides = [1, 1, 1]} : vector<10x16x4xf32> to vector<8x16x4xf32>
    %c5 = arith.constant 5 : index
    %c0_30 = arith.constant 0 : index
    %c0_31 = arith.constant 0 : index
    %63 = vector.load %arg4[%c5, %c0_30, %c0_31] : memref<9x1x4xf32, #tpu.memory_space<vmem>>, vector<1x1x4xf32>
    %64 = vector.shape_cast %63 : vector<1x1x4xf32> to vector<1x4xf32>
    %65 = vector.shape_cast %64 : vector<1x4xf32> to vector<1x1x4xf32>
    %66 = vector.broadcast %65 : vector<1x1x4xf32> to vector<8x16x4xf32>
    %67 = arith.mulf %62, %66 : vector<8x16x4xf32>
    %68 = arith.addf %61, %67 : vector<8x16x4xf32>
    %69 = vector.extract_strided_slice %54 {offsets = [2, 0, 0], sizes = [8, 16, 4], strides = [1, 1, 1]} : vector<10x16x4xf32> to vector<8x16x4xf32>
    %c8_32 = arith.constant 8 : index
    %c0_33 = arith.constant 0 : index
    %c0_34 = arith.constant 0 : index
    %70 = vector.load %arg4[%c8_32, %c0_33, %c0_34] : memref<9x1x4xf32, #tpu.memory_space<vmem>>, vector<1x1x4xf32>
    %71 = vector.shape_cast %70 : vector<1x1x4xf32> to vector<1x4xf32>
    %72 = vector.shape_cast %71 : vector<1x4xf32> to vector<1x1x4xf32>
    %73 = vector.broadcast %72 : vector<1x1x4xf32> to vector<8x16x4xf32>
    %74 = arith.mulf %69, %73 : vector<8x16x4xf32>
    %75 = arith.addf %68, %74 : vector<8x16x4xf32>
    %76 = vector.shape_cast %75 : vector<8x16x4xf32> to vector<128x4xf32>
    %c0_35 = arith.constant 0 : index
    %c0_36 = arith.constant 0 : index
    %77 = vector.load %arg5[%c0_35, %c0_36] : memref<4x8xf32, #tpu.memory_space<vmem>>, vector<4x8xf32>
    %cst_37 = arith.constant dense<0.000000e+00> : vector<128x8xf32>
    %78 = tpu.matmul %76, %77, %cst_37 {dimension_numbers = #tpu.dot_dimension_numbers<[1], [0], [0], [1], [0, 0, 1, 1], [], []>} : vector<128x4xf32>, vector<4x8xf32>, vector<128x8xf32> -> vector<128x8xf32>
    %c0_38 = arith.constant 0 : index
    %c0_39 = arith.constant 0 : index
    %79 = vector.load %arg6[%c0_38, %c0_39] : memref<1x8xf32, #tpu.memory_space<vmem>>, vector<1x8xf32>
    %80 = vector.broadcast %79 : vector<1x8xf32> to vector<128x8xf32>
    %81 = arith.addf %78, %80 : vector<128x8xf32>
    %82 = vector.shape_cast %81 : vector<128x8xf32> to vector<8x16x8xf32>
    %c0_40 = arith.constant 0 : index
    %c0_41 = arith.constant 0 : index
    %c0_42 = arith.constant 0 : index
    %c0_43 = arith.constant 0 : index
    %83 = vector.load %arg7[%c0_40, %c0_41, %c0_42, %c0_43] : memref<1x8x16x8xf32, #tpu.memory_space<vmem>>, vector<1x8x16x8xf32>
    %84 = vector.shape_cast %83 : vector<1x8x16x8xf32> to vector<8x16x8xf32>
    %85 = vector.shape_cast %82 : vector<8x16x8xf32> to vector<1x8x16x8xf32>
    tpu.vector_store %arg7[%c0_40, %c0_41, %c0_42, %c0_43], %85 {strides = array<i32>} : memref<1x8x16x8xf32, #tpu.memory_space<vmem>>, vector<1x8x16x8xf32>,
    return
  }
  func.func @transform_0(%arg0: i32, %arg1: i32) -> (i32, i32, i32, i32) {
    %c0_i32 = arith.constant 0 : i32
    %c0_i32_0 = arith.constant 0 : i32
    %c0_i32_1 = arith.constant 0 : i32
    return %arg0, %arg1, %c0_i32, %c0_i32_0 : i32, i32, i32, i32
  }
  func.func @transform_1(%arg0: i32, %arg1: i32) -> (i32, i32, i32, i32) {
    %c1_i32 = arith.constant 1 : i32
    %0 = arith.addi %arg1, %c1_i32 : i32
    %c4_i32 = arith.constant 4 : i32
    %1 = arith.muli %0, %c4_i32 : i32
    %c0_i32 = arith.constant 0 : i32
    %c0_i32_0 = arith.constant 0 : i32
    %c0_i32_1 = arith.constant 0 : i32
    return %arg0, %1, %c0_i32, %c0_i32_0 : i32, i32, i32, i32
  }
  func.func @transform_2(%arg0: i32, %arg1: i32) -> (i32, i32, i32) {
    %c0_i32 = arith.constant 0 : i32
    %c0_i32_0 = arith.constant 0 : i32
    %c0_i32_1 = arith.constant 0 : i32
    %c0_i32_2 = arith.constant 0 : i32
    return %c0_i32, %c0_i32_0, %c0_i32_1 : i32, i32, i32
  }
  func.func @transform_3(%arg0: i32, %arg1: i32) -> (i32, i32) {
    %c0_i32 = arith.constant 0 : i32
    %c0_i32_0 = arith.constant 0 : i32
    %c0_i32_1 = arith.constant 0 : i32
    return %c0_i32, %c0_i32_0 : i32, i32
  }
  func.func @transform_4(%arg0: i32, %arg1: i32) -> (i32, i32) {
    %c0_i32 = arith.constant 0 : i32
    %c0_i32_0 = arith.constant 0 : i32
    %c0_i32_1 = arith.constant 0 : i32
    return %c0_i32, %c0_i32_0 : i32, i32
  }
  func.func @transform_5(%arg0: i32, %arg1: i32) -> (i32, i32, i32, i32) {
    %c0_i32 = arith.constant 0 : i32
    %c0_i32_0 = arith.constant 0 : i32
    %c0_i32_1 = arith.constant 0 : i32
    return %arg0, %arg1, %c0_i32, %c0_i32_0 : i32, i32, i32, i32
  }
}

</mosaic_0001>

<llo_original>
// kernel: tpu_custom_call.1
$region0: #{tpu_custom_call.1}
  #allocation0 [shape = 'u32[]', space=smem, size = 0x4, offset = 0x4, fixed_abs, tag = 'smem constant byte address 0x4 - core index']
  #allocation1 [shape = 'u32[144,128]{1,0:T(1,128)}', space=vmem, size = 0x12000, scoped, tag = 'internal scratch']
  #allocation2 [shape = 'f32[10,24,4]{2,1,0:T(8,128)}', space=vmem, size = 0x1e000, scoped, tag = 'scratch operand']
  %s0 = inlined_call_operand.vmem [shape: f32[2,18,24,4], index: 0, kind: input, shape index: {}]
  %s1 = inlined_call_operand.vmem [shape: f32[2,18,24,4], index: 1, kind: input, shape index: {}]
  %s2 = inlined_call_operand.vmem [shape: f32[9,1,4], index: 2, kind: input, shape index: {}]
  %s3 = inlined_call_operand.vmem [shape: f32[4,8], index: 3, kind: input, shape index: {}]
  %s4 = inlined_call_operand.vmem [shape: f32[1,8], index: 4, kind: input, shape index: {}]
  %s5 = inlined_call_operand.vmem [shape: f32[2,16,16,8], index: 5, kind: output, shape index: {}]
  %s6 = sld [smem:[#allocation0]]
  $region53: #{tpu_custom_call.1} parent=0
    _
  %s8 = ssub.s32 1, %s6
  %s9 = scalar_select 0, %s8, %s6
  loop: start=0, step=1, limit=6
  $region2: #{tpu_custom_call.1} parent=0 // loop_pre_header
    _
  $region3: #{tpu_custom_call.1} parent=0 // loop_header
    %s11 = sphi 0, %s15
    %p12 = scmp.ge.s32.totalorder %s11, 6
    %s18 = sphi 0, %s30
    %s19 = sphi 0, %s26
    %s20 = sphi 0, %s18
    %s21 = sphi 0, %s19
    %s22 = sphi 0, %s20
    %s23 = sphi 0, %s21
    %s35 = sphi 0, %s37
    %s38 = sphi 0, %s35
    %s39 = sphi 0, %s38
    %s55 = sphi 0, %s39
    %s67 = sphi 0, %s69
    %s70 = sphi 0, %s67
    %s71 = sphi 0, %s70
    %s87 = sphi 0, %s71
    %s91 = sphi 0, %s91
    %s93 = sphi 0, %s91
    %s94 = sphi 0, %s93
    %s108 = sphi 0, %s94
    %s112 = sphi 0, %s112
    %s114 = sphi 0, %s112
    %s115 = sphi 0, %s114
    %s129 = sphi 0, %s115
    %s133 = sphi 0, %s133
    %s135 = sphi 0, %s133
    %s136 = sphi 0, %s135
    %s150 = sphi 0, %s136
    %s158 = sphi 0, %s160
    %s161 = sphi 0, %s158
    %s162 = sphi 0, %s161
    %s178 = sphi 0, %s162
  $region4: #{tpu_custom_call.1} parent=0 // loop_header_branch
    %14 = sbr.rel (%p12) target = $region8
  $region5: #{tpu_custom_call.1} parent=0 // loop_body
    %s16 = ssub.s32 %s11, 1
    %s17 = ssub.s32 %s11, 2
    %s24 = sadd.s32 1, %s19
    %p25 = scmp.ge.s32.totalorder %s24, 2
    %s26 = scalar_select %p25, 0, %s24
    %s27 = sadd.s32 1, %s18
    %s28 = scalar_select %p25, %s27, %s18
    %p29 = scmp.ge.s32.totalorder %s28, 2
    %s30 = scalar_select %p29, 0, %s28
    %s31 = ssub.s32 %s18, %s30
    %s32 = ssub.s32 %s19, %s26
    %s33 = sor.u32 %s31, %s32
    %p34 = scmp.eq.s32.totalorder %s33, 0
    %s36 = sadd.s32 %s35, 1
    %s37 = scalar_select %p34, %s35, %s36
    %p40 = pneg %p34
    %p41 = scmp.eq.s32.totalorder %s11, 3
    %p42 = por %p40, %p41
    %p43 = scmp.ne.s32.totalorder %s35, %s38
    %p44 = scmp.eq.s32.totalorder %s11, 0
    %p45 = por %p43, %p44
    %p46 = scmp.ne.s32.totalorder %s35, %s38
    %p47 = scmp.eq.s32.totalorder %s16, 3
    %p48 = por %p46, %p47
    %p49 = scmp.ne.s32.totalorder %s38, %s39
    %p50 = scmp.eq.s32.totalorder %s16, 0
    %p51 = por %p49, %p50
    %p52 = scmp.ne.s32.totalorder %s38, %s39
    %p53 = scmp.eq.s32.totalorder %s17, 3
    %p54 = por %p52, %p53
    %p56 = scmp.ne.s32.totalorder %s39, %s55
    %p57 = scmp.eq.s32.totalorder %s17, 0
    %p58 = por %p56, %p57
    %s59 = sadd.s32 %s19, 1
    %s60 = smul.u32 %s59, 4
    %s61 = sadd.s32 %s26, 1
    %s62 = smul.u32 %s61, 4
    %s63 = ssub.s32 %s18, %s30
    %s64 = ssub.s32 %s60, %s62
    %s65 = sor.u32 %s63, %s64
    %p66 = scmp.eq.s32.totalorder %s65, 0
    %s68 = sadd.s32 %s67, 1
    %s69 = scalar_select %p66, %s67, %s68
    %p72 = pneg %p66
    %p73 = scmp.eq.s32.totalorder %s11, 3
    %p74 = por %p72, %p73
    %p75 = scmp.ne.s32.totalorder %s67, %s70
    %p76 = scmp.eq.s32.totalorder %s11, 0
    %p77 = por %p75, %p76
    %p78 = scmp.ne.s32.totalorder %s67, %s70
    %p79 = scmp.eq.s32.totalorder %s16, 3
    %p80 = por %p78, %p79
    %p81 = scmp.ne.s32.totalorder %s70, %s71
    %p82 = scmp.eq.s32.totalorder %s16, 0
    %p83 = por %p81, %p82
    %p84 = scmp.ne.s32.totalorder %s70, %s71
    %p85 = scmp.eq.s32.totalorder %s17, 3
    %p86 = por %p84, %p85
    %p88 = scmp.ne.s32.totalorder %s71, %s87
    %p89 = scmp.eq.s32.totalorder %s17, 0
    %p90 = por %p88, %p89
    %s92 = sadd.s32 %s91, 1
    %p95 = scmp.eq.s32.totalorder %s11, 3
    %p96 = scmp.ne.s32.totalorder %s91, %s93
    %p97 = scmp.eq.s32.totalorder %s11, 0
    %p98 = por %p96, %p97
    %p99 = scmp.ne.s32.totalorder %s91, %s93
    %p100 = scmp.eq.s32.totalorder %s16, 3
    %p101 = por %p99, %p100
    %p102 = scmp.ne.s32.totalorder %s93, %s94
    %p103 = scmp.eq.s32.totalorder %s16, 0
    %p104 = por %p102, %p103
    %p105 = scmp.ne.s32.totalorder %s93, %s94
    %p106 = scmp.eq.s32.totalorder %s17, 3
    %p107 = por %p105, %p106
    %p109 = scmp.ne.s32.totalorder %s94, %s108
    %p110 = scmp.eq.s32.totalorder %s17, 0
    %p111 = por %p109, %p110
    %s113 = sadd.s32 %s112, 1
    %p116 = scmp.eq.s32.totalorder %s11, 3
    %p117 = scmp.ne.s32.totalorder %s112, %s114
    %p118 = scmp.eq.s32.totalorder %s11, 0
    %p119 = por %p117, %p118
    %p120 = scmp.ne.s32.totalorder %s112, %s114
    %p121 = scmp.eq.s32.totalorder %s16, 3
    %p122 = por %p120, %p121
    %p123 = scmp.ne.s32.totalorder %s114, %s115
    %p124 = scmp.eq.s32.totalorder %s16, 0
    %p125 = por %p123, %p124
    %p126 = scmp.ne.s32.totalorder %s114, %s115
    %p127 = scmp.eq.s32.totalorder %s17, 3
    %p128 = por %p126, %p127
    %p130 = scmp.ne.s32.totalorder %s115, %s129
    %p131 = scmp.eq.s32.totalorder %s17, 0
    %p132 = por %p130, %p131
    %s134 = sadd.s32 %s133, 1
    %p137 = scmp.eq.s32.totalorder %s11, 3
    %p138 = scmp.ne.s32.totalorder %s133, %s135
    %p139 = scmp.eq.s32.totalorder %s11, 0
    %p140 = por %p138, %p139
    %p141 = scmp.ne.s32.totalorder %s133, %s135
    %p142 = scmp.eq.s32.totalorder %s16, 3
    %p143 = por %p141, %p142
    %p144 = scmp.ne.s32.totalorder %s135, %s136
    %p145 = scmp.eq.s32.totalorder %s16, 0
    %p146 = por %p144, %p145
    %p147 = scmp.ne.s32.totalorder %s135, %s136
    %p148 = scmp.eq.s32.totalorder %s17, 3
    %p149 = por %p147, %p148
    %p151 = scmp.ne.s32.totalorder %s136, %s150
    %p152 = scmp.eq.s32.totalorder %s17, 0
    %p153 = por %p151, %p152
    %s154 = ssub.s32 %s18, %s30
    %s155 = ssub.s32 %s19, %s26
    %s156 = sor.u32 %s154, %s155
    %p157 = scmp.eq.s32.totalorder %s156, 0
    %s159 = sadd.s32 %s158, 1
    %s160 = scalar_select %p157, %s158, %s159
    %p163 = pneg %p157
    %p164 = scmp.eq.s32.totalorder %s11, 3
    %p165 = por %p163, %p164
    %p166 = scmp.ne.s32.totalorder %s158, %s161
    %p167 = scmp.eq.s32.totalorder %s11, 0
    %p168 = por %p166, %p167
    %p169 = scmp.ne.s32.totalorder %s158, %s161
    %p170 = scmp.eq.s32.totalorder %s16, 3
    %p171 = por %p169, %p170
    %p172 = scmp.ne.s32.totalorder %s161, %s162
    %p173 = scmp.eq.s32.totalorder %s16, 0
    %p174 = por %p172, %p173
    %p175 = scmp.ne.s32.totalorder %s161, %s162
    %p176 = scmp.eq.s32.totalorder %s17, 3
    %p177 = por %p175, %p176
    %p179 = scmp.ne.s32.totalorder %s162, %s178
    %p180 = scmp.eq.s32.totalorder %s17, 0
    %p181 = por %p179, %p180
    %p182 = scmp.le.s32.totalorder 1, %s11
    %p183 = scmp.lt.s32.totalorder %s11, 5
    %p184 = pnand %p182, %p183
    %p185 = pneg %p184
    // Predicated region
    $region9: #{tpu_custom_call.1} parent=5 // pred_check
      _
    $region10: #{tpu_custom_call.1} parent=5 // pred_check_branch
      %187 = sbr.rel (%p184) target = $region12
    $region11: #{tpu_custom_call.1} parent=5 // pred_region
      %s188 = ssub.s32 %s11, 1
      // Predicated region
      $region13: #{tpu_custom_call.1} parent=11 // pred_check
        %p189 = pneg %p104
      $region14: #{tpu_custom_call.1} parent=11 // pred_check_branch
        %191 = sbr.rel (%p189) target = $region16
      $region15: #{tpu_custom_call.1} parent=11 // pred_region
        _
      $region16: #{tpu_custom_call.1} parent=11 // pred_fallthru
        _
      // Predicated region
      $region17: #{tpu_custom_call.1} parent=11 // pred_check
        %p192 = pneg %p125
      $region18: #{tpu_custom_call.1} parent=11 // pred_check_branch
        %194 = sbr.rel (%p192) target = $region20
      $region19: #{tpu_custom_call.1} parent=11 // pred_region
        _
      $region20: #{tpu_custom_call.1} parent=11 // pred_fallthru
        _
      // Predicated region
      $region21: #{tpu_custom_call.1} parent=11 // pred_check
        %p195 = pneg %p146
      $region22: #{tpu_custom_call.1} parent=11 // pred_check_branch
        %197 = sbr.rel (%p195) target = $region24
      $region23: #{tpu_custom_call.1} parent=11 // pred_region
        _
      $region24: #{tpu_custom_call.1} parent=11 // pred_fallthru
        _
    $region12: #{tpu_custom_call.1} parent=5 // pred_fallthru
      _
    %p198 = scmp.lt.s32.totalorder %s11, 4
    // Predicated region
    $region25: #{tpu_custom_call.1} parent=5 // pred_check
      %p199 = pneg %p198
    $region26: #{tpu_custom_call.1} parent=5 // pred_check_branch
      %201 = sbr.rel (%p199) target = $region28
    $region27: #{tpu_custom_call.1} parent=5 // pred_region
      // Predicated region
      $region29: #{tpu_custom_call.1} parent=27 // pred_check
        %p202 = pneg %p45
      $region30: #{tpu_custom_call.1} parent=27 // pred_check_branch
        %204 = sbr.rel (%p202) target = $region32
      $region31: #{tpu_custom_call.1} parent=27 // pred_region
        %s205 = smul.u32 8, %s19
        %s206 = ssub.s32 18, %s205
        %p207 = scmp.lt.s32.totalorder %s206, 8
        %s208 = scalar_select %p207, %s206, 8
        %s209 = smul.u32 128, %s208
        %s210 = smul.u32 %s209, 3
        %p211 = scmp.lt.s32.totalorder %s18, 1
        %s212 = scalar_select %p211, %s18, 1
        %p213 = scmp.lt.s32.totalorder %s205, 17
        %s214 = scalar_select %p213, %s205, 17
        %s215 = smul.addr %s214, 3
        %s216 = smul.addr %s212, 54
        %s217 = sadd.s32 %s215, %s216
        %s218 = smul.addr %s217, 8
        %s219 = scalar_lea.vmem %s0, %s218
        %s220 = smul.u32 8, %s19
        %s221 = ssub.s32 18, %s220
        %p222 = scmp.lt.s32.totalorder %s221, 8
        %s223 = scalar_select %p222, %s221, 8
        %s224 = smul.u32 128, %s223
        %s225 = smul.u32 %s224, 3
      $region32: #{tpu_custom_call.1} parent=27 // pred_fallthru
        _
      // Predicated region
      $region33: #{tpu_custom_call.1} parent=27 // pred_check
        %p226 = pneg %p77
      $region34: #{tpu_custom_call.1} parent=27 // pred_check_branch
        %228 = sbr.rel (%p226) target = $region36
      $region35: #{tpu_custom_call.1} parent=27 // pred_region
        %s229 = sadd.s32 %s19, 1
        %s230 = smul.u32 %s229, 4
        %s231 = smul.u32 2, %s230
        %p232 = scmp.lt.s32.totalorder %s18, 1
        %s233 = scalar_select %p232, %s18, 1
        %p234 = scmp.lt.s32.totalorder %s231, 17
        %s235 = scalar_select %p234, %s231, 17
        %s236 = smul.addr %s235, 3
        %s237 = smul.addr %s233, 54
        %s238 = sadd.s32 %s236, %s237
        %s239 = smul.addr %s238, 8
        %s240 = scalar_lea.vmem %s1, %s239
        %s241 = sadd.s32 %s19, 1
        %s242 = smul.u32 %s241, 4
        %s243 = smul.u32 2, %s242
      $region36: #{tpu_custom_call.1} parent=27 // pred_fallthru
        _
    $region28: #{tpu_custom_call.1} parent=5 // pred_fallthru
      _
    %p244 = scmp.le.s32.totalorder 1, %s11
    %p245 = scmp.lt.s32.totalorder %s11, 5
    %p246 = pnand %p244, %p245
    %p247 = pneg %p246
    // Predicated region
    $region37: #{tpu_custom_call.1} parent=5 // pred_check
      _
    $region38: #{tpu_custom_call.1} parent=5 // pred_check_branch
      %249 = sbr.rel (%p246) target = $region40
    $region39: #{tpu_custom_call.1} parent=5 // pred_region
      %s250 = ssub.s32 %s11, 1
      %s251 = smul.u32 8, %s21
      %s252 = ssub.s32 18, %s251
      %p253 = scmp.lt.s32.totalorder %s252, 8
      %s254 = scalar_select %p253, %s252, 8
      %s255 = smul.u32 128, %s254
      %s256 = smul.u32 %s255, 3
      %p257 = scmp.lt.s32.totalorder %s20, 1
      %s258 = scalar_select %p257, %s20, 1
      %p259 = scmp.lt.s32.totalorder %s251, 17
      %s260 = scalar_select %p259, %s251, 17
      %s261 = smul.addr %s260, 3
      %s262 = smul.addr %s258, 54
      %s263 = sadd.s32 %s261, %s262
      %s264 = smul.addr %s263, 8
      %s265 = scalar_lea.vmem %s0, %s264
      %p266 = pneg %p51
      %p267 = pneg %p48
      %s268 = sadd.s32 %s21, 1
      %s269 = smul.u32 %s268, 4
      %s270 = smul.u32 2, %s269
      %p271 = scmp.lt.s32.totalorder %s20, 1
      %s272 = scalar_select %p271, %s20, 1
      %p273 = scmp.lt.s32.totalorder %s270, 17
      %s274 = scalar_select %p273, %s270, 17
      %s275 = smul.addr %s274, 3
      %s276 = smul.addr %s272, 54
      %s277 = sadd.s32 %s275, %s276
      %s278 = smul.addr %s277, 8
      %s279 = scalar_lea.vmem %s1, %s278
      %p280 = pneg %p83
      %p281 = pneg %p80
      %p282 = pneg %p104
      %p283 = pneg %p101
      %p284 = pneg %p125
      %p285 = pneg %p122
      %p286 = pneg %p146
      %p287 = pneg %p143
      %p288 = pneg %p174
      %p289 = pneg %p171
      %s290 = smul.u32 8, %s21
      %p291 = scmp.lt.s32.totalorder %s20, 1
      %s292 = scalar_select %p291, %s20, 1
      %p293 = scmp.lt.s32.totalorder %s290, 15
      %s294 = scalar_select %p293, %s290, 15
      %s295 = smul.addr %s294, 2
      %s296 = smul.addr %s292, 32
      %s297 = sadd.s32 %s295, %s296
      %s298 = smul.addr %s297, 8
      %s299 = scalar_lea.vmem %s5, %s298
      %s300 = smul.u32 8, %s21
      %s301 = ssub.s32 18, %s300
      %p302 = scmp.lt.s32.totalorder %s301, 8
      %s303 = scalar_select %p302, %s301, 8
      %s304 = smul.u32 128, %s303
      %s305 = smul.u32 %s304, 3
      %p306 = scmp.lt.s32.totalorder %s20, 1
      %s307 = scalar_select %p306, %s20, 1
      %p308 = scmp.lt.s32.totalorder %s300, 17
      %s309 = scalar_select %p308, %s300, 17
      %s310 = smul.addr %s309, 3
      %s311 = smul.addr %s307, 54
      %s312 = sadd.s32 %s310, %s311
      %s313 = smul.addr %s312, 8
      %s314 = scalar_lea.vmem %s0, %s313
      %s315 = smul.u32 8, %s21
      %s316 = ssub.s32 18, %s315
      %p317 = scmp.lt.s32.totalorder %s316, 8
      %s318 = scalar_select %p317, %s316, 8
      %s319 = smul.u32 128, %s318
      %s320 = smul.u32 %s319, 3
      %s321 = sadd.s32 %s21, 1
      %s322 = smul.u32 %s321, 4
      %s323 = smul.u32 2, %s322
      %p324 = scmp.lt.s32.totalorder %s20, 1
      %s325 = scalar_select %p324, %s20, 1
      %p326 = scmp.lt.s32.totalorder %s323, 17
      %s327 = scalar_select %p326, %s323, 17
      %s328 = smul.addr %s327, 3
      %s329 = smul.addr %s325, 54
      %s330 = sadd.s32 %s328, %s329
      %s331 = smul.addr %s330, 8
      %s332 = scalar_lea.vmem %s1, %s331
      %s333 = sadd.s32 %s21, 1
      %s334 = smul.u32 %s333, 4
      %s335 = smul.u32 2, %s334
      %s336 = smul.u32 8, %s21
      %p337 = scmp.lt.s32.totalorder %s20, 1
      %s338 = scalar_select %p337, %s20, 1
      %p339 = scmp.lt.s32.totalorder %s336, 15
      %s340 = scalar_select %p339, %s336, 15
      %s341 = smul.addr %s340, 2
      %s342 = smul.addr %s338, 32
      %s343 = sadd.s32 %s341, %s342
      %s344 = smul.addr %s343, 8
      %s345 = scalar_lea.vmem %s5, %s344
      %s346 = smul.u32 8, %s21
      %v347 = vld [vmem:[%s314] sm:$0xff]
      %v348 = vld [vmem:[%s314 + $0x8] sm:$0xff]
      %v349 = vld [vmem:[%s314 + $0x10] sm:$0xff]
      %v350 = vld [vmem:[%s314 + $0x18] sm:$0xff]
      %v351 = vld [vmem:[%s314 + $0x20] sm:$0xff]
      %v352 = vld [vmem:[%s314 + $0x28] sm:$0xff]
      %v353 = vld [vmem:[%s314 + $0x30] sm:$0xff]
      %v354 = vld [vmem:[%s314 + $0x38] sm:$0xff]
      %v355 = vld [vmem:[%s314 + $0x40] sm:$0xff]
      %v356 = vld [vmem:[%s314 + $0x48] sm:$0xff]
      %v357 = vld [vmem:[%s314 + $0x50] sm:$0xff]
      %v358 = vld [vmem:[%s314 + $0x58] sm:$0xff]
      %v359 = vld [vmem:[%s314 + $0x60] sm:$0xff]
      %v360 = vld [vmem:[%s314 + $0x68] sm:$0xff]
      %v361 = vld [vmem:[%s314 + $0x70] sm:$0xff]
      %v362 = vld [vmem:[%s314 + $0x78] sm:$0xff]
      %v363 = vld [vmem:[%s314 + $0x80] sm:$0xff]
      %v364 = vld [vmem:[%s314 + $0x88] sm:$0xff]
      %v365 = vld [vmem:[%s314 + $0x90] sm:$0xff]
      %v366 = vld [vmem:[%s314 + $0x98] sm:$0xff]
      %v367 = vld [vmem:[%s314 + $0xa0] sm:$0xff]
      %v368 = vld [vmem:[%s314 + $0xa8] sm:$0xff]
      %v369 = vld [vmem:[%s314 + $0xb0] sm:$0xff]
      %v370 = vld [vmem:[%s314 + $0xb8] sm:$0xff]
      %vm371 = vcmask 31744
      %372 = vst.msk [vmem:[#allocation2] sm:$0xff] %vm371, %v347
      %373 = vst.msk [vmem:[#allocation2 + $0x8] sm:$0xff] %vm371, %v348
      %374 = vst.msk [vmem:[#allocation2 + $0x10] sm:$0xff] %vm371, %v349
      %375 = vst.msk [vmem:[#allocation2 + $0x18] sm:$0xff] %vm371, %v350
      %376 = vst.msk [vmem:[#allocation2 + $0x20] sm:$0xff] %vm371, %v351
      %377 = vst.msk [vmem:[#allocation2 + $0x28] sm:$0xff] %vm371, %v352
      %378 = vst.msk [vmem:[#allocation2 + $0x30] sm:$0xff] %vm371, %v353
      %379 = vst.msk [vmem:[#allocation2 + $0x38] sm:$0xff] %vm371, %v354
      %380 = vst.msk [vmem:[#allocation2 + $0x40] sm:$0xff] %vm371, %v355
      %381 = vst.msk [vmem:[#allocation2 + $0x48] sm:$0xff] %vm371, %v356
      %382 = vst.msk [vmem:[#allocation2 + $0x50] sm:$0xff] %vm371, %v357
      %383 = vst.msk [vmem:[#allocation2 + $0x58] sm:$0xff] %vm371, %v358
      %384 = vst.msk [vmem:[#allocation2 + $0x60] sm:$0xff] %vm371, %v359
      %385 = vst.msk [vmem:[#allocation2 + $0x68] sm:$0xff] %vm371, %v360
      %386 = vst.msk [vmem:[#allocation2 + $0x70] sm:$0xff] %vm371, %v361
      %387 = vst.msk [vmem:[#allocation2 + $0x78] sm:$0xff] %vm371, %v362
      %388 = vst.msk [vmem:[#allocation2 + $0x80] sm:$0xff] %vm371, %v363
      %389 = vst.msk [vmem:[#allocation2 + $0x88] sm:$0xff] %vm371, %v364
      %390 = vst.msk [vmem:[#allocation2 + $0x90] sm:$0xff] %vm371, %v365
      %391 = vst.msk [vmem:[#allocation2 + $0x98] sm:$0xff] %vm371, %v366
      %392 = vst.msk [vmem:[#allocation2 + $0xa0] sm:$0xff] %vm371, %v367
      %393 = vst.msk [vmem:[#allocation2 + $0xa8] sm:$0xff] %vm371, %v368
      %394 = vst.msk [vmem:[#allocation2 + $0xb0] sm:$0xff] %vm371, %v369
      %395 = vst.msk [vmem:[#allocation2 + $0xb8] sm:$0xff] %vm371, %v370
      %v396 = vld [vmem:[%s332] sm:$0xff]
      %v397 = vld [vmem:[%s332 + $0x8] sm:$0xff]
      %v398 = vld [vmem:[%s332 + $0x10] sm:$0xff]
      %v399 = vld [vmem:[%s332 + $0x18] sm:$0xff]
      %v400 = vld [vmem:[%s332 + $0x20] sm:$0xff]
      %v401 = vld [vmem:[%s332 + $0x28] sm:$0xff]
      %s402 = scalar_lea.vmem [#allocation2], 192
      %403 = vst.msk [vmem:[%s402] sm:$0xff] %vm371, %v396
      %404 = vst.msk [vmem:[%s402 + $0x8] sm:$0xff] %vm371, %v397
      %405 = vst.msk [vmem:[%s402 + $0x10] sm:$0xff] %vm371, %v398
      %406 = vst.msk [vmem:[%s402 + $0x18] sm:$0xff] %vm371, %v399
      %407 = vst.msk [vmem:[%s402 + $0x20] sm:$0xff] %vm371, %v400
      %408 = vst.msk [vmem:[%s402 + $0x28] sm:$0xff] %vm371, %v401
      %v409 = vld [vmem:[#allocation2] sm:$0xff]
      %v410 = vld [vmem:[#allocation2 + $0x8] sm:$0xff]
      %v411 = vld [vmem:[#allocation2 + $0x10] sm:$0xff]
      %v412 = vld [vmem:[#allocation2 + $0x18] sm:$0xff]
      %v413 = vld [vmem:[#allocation2 + $0x20] sm:$0xff]
      %v414 = vld [vmem:[#allocation2 + $0x28] sm:$0xff]
      %v415 = vld [vmem:[#allocation2 + $0x30] sm:$0xff]
      %v416 = vld [vmem:[#allocation2 + $0x38] sm:$0xff]
      %v417 = vld [vmem:[#allocation2 + $0x40] sm:$0xff]
      %v418 = vld [vmem:[#allocation2 + $0x48] sm:$0xff]
      %v419 = vld [vmem:[#allocation2 + $0x50] sm:$0xff]
      %v420 = vld [vmem:[#allocation2 + $0x58] sm:$0xff]
      %v421 = vld [vmem:[#allocation2 + $0x60] sm:$0xff]
      %v422 = vld [vmem:[#allocation2 + $0x68] sm:$0xff]
      %v423 = vld [vmem:[#allocation2 + $0x70] sm:$0xff]
      %v424 = vld [vmem:[#allocation2 + $0x78] sm:$0xff]
      %v425 = vld [vmem:[#allocation2 + $0x80] sm:$0xff]
      %v426 = vld [vmem:[#allocation2 + $0x88] sm:$0xff]
      %v427 = vld [vmem:[#allocation2 + $0x90] sm:$0xff]
      %v428 = vld [vmem:[#allocation2 + $0x98] sm:$0xff]
      %v429 = vld [vmem:[#allocation2 + $0xa0] sm:$0xff]
      %v430 = vld [vmem:[#allocation2 + $0xa8] sm:$0xff]
      %v431 = vld [vmem:[#allocation2 + $0xb0] sm:$0xff]
      %v432 = vld [vmem:[#allocation2 + $0xb8] sm:$0xff]
      %v433 = vld [vmem:[#allocation2 + $0xc0] sm:$0xff]
      %v434 = vld [vmem:[#allocation2 + $0xc8] sm:$0xff]
      %v435 = vld [vmem:[#allocation2 + $0xd0] sm:$0xff]
      %v436 = vld [vmem:[#allocation2 + $0xd8] sm:$0xff]
      %v437 = vld [vmem:[#allocation2 + $0xe0] sm:$0xff]
      %v438 = vld [vmem:[#allocation2 + $0xe8] sm:$0xff]
      %v439 = vld [vmem:[%s2] sm:$0x1]
      %v441 = vlaneseq
      %v442 = vshrl.u32 %v441, 7
      %v443 = vsub.s32 0, %v442
      %v444 = vrot.slane %v439, %v443
      %v446 = vmul.f32 %v409, %v444
      %v447 = vmul.f32 %v410, %v444
      %v448 = vmul.f32 %v412, %v444
      %v449 = vmul.f32 %v413, %v444
      %v450 = vmul.f32 %v415, %v444
      %v451 = vmul.f32 %v416, %v444
      %v452 = vmul.f32 %v418, %v444
      %v453 = vmul.f32 %v419, %v444
      %v454 = vmul.f32 %v421, %v444
      %v455 = vmul.f32 %v422, %v444
      %v456 = vmul.f32 %v424, %v444
      %v457 = vmul.f32 %v425, %v444
      %v458 = vmul.f32 %v427, %v444
      %v459 = vmul.f32 %v428, %v444
      %v460 = vmul.f32 %v430, %v444
      %v461 = vmul.f32 %v431, %v444
      %v462 = vadd.f32 %v446, 0.0
      %v463 = vadd.f32 %v447, 0.0
      %v464 = vadd.f32 %v448, 0.0
      %v465 = vadd.f32 %v449, 0.0
      %v466 = vadd.f32 %v450, 0.0
      %v467 = vadd.f32 %v451, 0.0
      %v468 = vadd.f32 %v452, 0.0
      %v469 = vadd.f32 %v453, 0.0
      %v470 = vadd.f32 %v454, 0.0
      %v471 = vadd.f32 %v455, 0.0
      %v472 = vadd.f32 %v456, 0.0
      %v473 = vadd.f32 %v457, 0.0
      %v474 = vadd.f32 %v458, 0.0
      %v475 = vadd.f32 %v459, 0.0
      %v476 = vadd.f32 %v460, 0.0
      %v477 = vadd.f32 %v461, 0.0
      %s478 = scalar_lea.vmem %s2, 3
      %v479 = vld [vmem:[%s478] sm:$0x1]
      %v481 = vlaneseq
      %v482 = vshrl.u32 %v481, 7
      %v483 = vsub.s32 0, %v482
      %v484 = vrot.slane %v479, %v483
      %v486 = vmul.f32 %v412, %v484
      %v487 = vmul.f32 %v413, %v484
      %v488 = vmul.f32 %v415, %v484
      %v489 = vmul.f32 %v416, %v484
      %v490 = vmul.f32 %v418, %v484
      %v491 = vmul.f32 %v419, %v484
      %v492 = vmul.f32 %v421, %v484
      %v493 = vmul.f32 %v422, %v484
      %v494 = vmul.f32 %v424, %v484
      %v495 = vmul.f32 %v425, %v484
      %v496 = vmul.f32 %v427, %v484
      %v497 = vmul.f32 %v428, %v484
      %v498 = vmul.f32 %v430, %v484
      %v499 = vmul.f32 %v431, %v484
      %v500 = vmul.f32 %v433, %v484
      %v501 = vmul.f32 %v434, %v484
      %v502 = vadd.f32 %v462, %v486
      %v503 = vadd.f32 %v463, %v487
      %v504 = vadd.f32 %v464, %v488
      %v505 = vadd.f32 %v465, %v489
      %v506 = vadd.f32 %v466, %v490
      %v507 = vadd.f32 %v467, %v491
      %v508 = vadd.f32 %v468, %v492
      %v509 = vadd.f32 %v469, %v493
      %v510 = vadd.f32 %v470, %v494
      %v511 = vadd.f32 %v471, %v495
      %v512 = vadd.f32 %v472, %v496
      %v513 = vadd.f32 %v473, %v497
      %v514 = vadd.f32 %v474, %v498
      %v515 = vadd.f32 %v475, %v499
      %v516 = vadd.f32 %v476, %v500
      %v517 = vadd.f32 %v477, %v501
      %s518 = scalar_lea.vmem %s2, 6
      %v519 = vld [vmem:[%s518] sm:$0x1]
      %v521 = vlaneseq
      %v522 = vshrl.u32 %v521, 7
      %v523 = vsub.s32 0, %v522
      %v524 = vrot.slane %v519, %v523
      %v526 = vmul.f32 %v415, %v524
      %v527 = vmul.f32 %v416, %v524
      %v528 = vmul.f32 %v418, %v524
      %v529 = vmul.f32 %v419, %v524
      %v530 = vmul.f32 %v421, %v524
      %v531 = vmul.f32 %v422, %v524
      %v532 = vmul.f32 %v424, %v524
      %v533 = vmul.f32 %v425, %v524
      %v534 = vmul.f32 %v427, %v524
      %v535 = vmul.f32 %v428, %v524
      %v536 = vmul.f32 %v430, %v524
      %v537 = vmul.f32 %v431, %v524
      %v538 = vmul.f32 %v433, %v524
      %v539 = vmul.f32 %v434, %v524
      %v540 = vmul.f32 %v436, %v524
      %v541 = vmul.f32 %v437, %v524
      %v542 = vadd.f32 %v502, %v526
      %v543 = vadd.f32 %v503, %v527
      %v544 = vadd.f32 %v504, %v528
      %v545 = vadd.f32 %v505, %v529
      %v546 = vadd.f32 %v506, %v530
      %v547 = vadd.f32 %v507, %v531
      %v548 = vadd.f32 %v508, %v532
      %v549 = vadd.f32 %v509, %v533
      %v550 = vadd.f32 %v510, %v534
      %v551 = vadd.f32 %v511, %v535
      %v552 = vadd.f32 %v512, %v536
      %v553 = vadd.f32 %v513, %v537
      %v554 = vadd.f32 %v514, %v538
      %v555 = vadd.f32 %v515, %v539
      %v556 = vadd.f32 %v516, %v540
      %v557 = vadd.f32 %v517, %v541
      %v558 = vrot.slane %v409, 1
      %v559 = vrot.slane %v412, 1
      %v560 = vrot.slane %v415, 1
      %v561 = vrot.slane %v418, 1
      %v562 = vrot.slane %v421, 1
      %v563 = vrot.slane %v424, 1
      %v564 = vrot.slane %v427, 1
      %v565 = vrot.slane %v430, 1
      %v566 = vrot.slane %v433, 1
      %v567 = vrot.slane %v436, 1
      %v568 = vrot.slane %v410, 1
      %v569 = vrot.slane %v413, 1
      %v570 = vrot.slane %v416, 1
      %v571 = vrot.slane %v419, 1
      %v572 = vrot.slane %v422, 1
      %v573 = vrot.slane %v425, 1
      %v574 = vrot.slane %v428, 1
      %v575 = vrot.slane %v431, 1
      %v576 = vrot.slane %v434, 1
      %v577 = vrot.slane %v437, 1
      %v578 = vrot.slane %v411, 1
      %v579 = vrot.slane %v414, 1
      %v580 = vrot.slane %v417, 1
      %v581 = vrot.slane %v420, 1
      %v582 = vrot.slane %v423, 1
      %v583 = vrot.slane %v426, 1
      %v584 = vrot.slane %v429, 1
      %v585 = vrot.slane %v432, 1
      %v586 = vrot.slane %v435, 1
      %v587 = vrot.slane %v438, 1
      %v588 = vlaneseq
      %v589 = vshrl.u32 %v588, 7
      %vm590 = vcmp.lt.s32.totalorder %v589, 7
      %v591 = vsel %vm590, %v568, %v578
      %v592 = vsel %vm590, %v569, %v579
      %v593 = vsel %vm590, %v570, %v580
      %v594 = vsel %vm590, %v571, %v581
      %v595 = vsel %vm590, %v572, %v582
      %v596 = vsel %vm590, %v573, %v583
      %v597 = vsel %vm590, %v574, %v584
      %v598 = vsel %vm590, %v575, %v585
      %v599 = vsel %vm590, %v576, %v586
      %v600 = vsel %vm590, %v577, %v587
      %v601 = vsel %vm590, %v558, %v568
      %v602 = vsel %vm590, %v559, %v569
      %v603 = vsel %vm590, %v560, %v570
      %v604 = vsel %vm590, %v561, %v571
      %v605 = vsel %vm590, %v562, %v572
      %v606 = vsel %vm590, %v563, %v573
      %v607 = vsel %vm590, %v564, %v574
      %v608 = vsel %vm590, %v565, %v575
      %v609 = vsel %vm590, %v566, %v576
      %v610 = vsel %vm590, %v567, %v577
      %s611 = scalar_lea.vmem %s2, 1
      %v612 = vld [vmem:[%s611] sm:$0x1]
      %v614 = vlaneseq
      %v615 = vshrl.u32 %v614, 7
      %v616 = vsub.s32 0, %v615
      %v617 = vrot.slane %v612, %v616
      %v619 = vmul.f32 %v601, %v617
      %v620 = vmul.f32 %v591, %v617
      %v621 = vmul.f32 %v602, %v617
      %v622 = vmul.f32 %v592, %v617
      %v623 = vmul.f32 %v603, %v617
      %v624 = vmul.f32 %v593, %v617
      %v625 = vmul.f32 %v604, %v617
      %v626 = vmul.f32 %v594, %v617
      %v627 = vmul.f32 %v605, %v617
      %v628 = vmul.f32 %v595, %v617
      %v629 = vmul.f32 %v606, %v617
      %v630 = vmul.f32 %v596, %v617
      %v631 = vmul.f32 %v607, %v617
      %v632 = vmul.f32 %v597, %v617
      %v633 = vmul.f32 %v608, %v617
      %v634 = vmul.f32 %v598, %v617
      %v635 = vadd.f32 %v542, %v619
      %v636 = vadd.f32 %v543, %v620
      %v637 = vadd.f32 %v544, %v621
      %v638 = vadd.f32 %v545, %v622
      %v639 = vadd.f32 %v546, %v623
      %v640 = vadd.f32 %v547, %v624
      %v641 = vadd.f32 %v548, %v625
      %v642 = vadd.f32 %v549, %v626
      %v643 = vadd.f32 %v550, %v627
      %v644 = vadd.f32 %v551, %v628
      %v645 = vadd.f32 %v552, %v629
      %v646 = vadd.f32 %v553, %v630
      %v647 = vadd.f32 %v554, %v631
      %v648 = vadd.f32 %v555, %v632
      %v649 = vadd.f32 %v556, %v633
      %v650 = vadd.f32 %v557, %v634
      %s651 = scalar_lea.vmem %s2, 4
      %v652 = vld [vmem:[%s651] sm:$0x1]
      %v654 = vlaneseq
      %v655 = vshrl.u32 %v654, 7
      %v656 = vsub.s32 0, %v655
      %v657 = vrot.slane %v652, %v656
      %v659 = vmul.f32 %v602, %v657
      %v660 = vmul.f32 %v592, %v657
      %v661 = vmul.f32 %v603, %v657
      %v662 = vmul.f32 %v593, %v657
      %v663 = vmul.f32 %v604, %v657
      %v664 = vmul.f32 %v594, %v657
      %v665 = vmul.f32 %v605, %v657
      %v666 = vmul.f32 %v595, %v657
      %v667 = vmul.f32 %v606, %v657
      %v668 = vmul.f32 %v596, %v657
      %v669 = vmul.f32 %v607, %v657
      %v670 = vmul.f32 %v597, %v657
      %v671 = vmul.f32 %v608, %v657
      %v672 = vmul.f32 %v598, %v657
      %v673 = vmul.f32 %v609, %v657
      %v674 = vmul.f32 %v599, %v657
      %v675 = vadd.f32 %v635, %v659
      %v676 = vadd.f32 %v636, %v660
      %v677 = vadd.f32 %v637, %v661
      %v678 = vadd.f32 %v638, %v662
      %v679 = vadd.f32 %v639, %v663
      %v680 = vadd.f32 %v640, %v664
      %v681 = vadd.f32 %v641, %v665
      %v682 = vadd.f32 %v642, %v666
      %v683 = vadd.f32 %v643, %v667
      %v684 = vadd.f32 %v644, %v668
      %v685 = vadd.f32 %v645, %v669
      %v686 = vadd.f32 %v646, %v670
      %v687 = vadd.f32 %v647, %v671
      %v688 = vadd.f32 %v648, %v672
      %v689 = vadd.f32 %v649, %v673
      %v690 = vadd.f32 %v650, %v674
      %s691 = scalar_lea.vmem %s2, 7
      %v692 = vld [vmem:[%s691] sm:$0x1]
      %v694 = vlaneseq
      %v695 = vshrl.u32 %v694, 7
      %v696 = vsub.s32 0, %v695
      %v697 = vrot.slane %v692, %v696
      %v699 = vmul.f32 %v603, %v697
      %v700 = vmul.f32 %v593, %v697
      %v701 = vmul.f32 %v604, %v697
      %v702 = vmul.f32 %v594, %v697
      %v703 = vmul.f32 %v605, %v697
      %v704 = vmul.f32 %v595, %v697
      %v705 = vmul.f32 %v606, %v697
      %v706 = vmul.f32 %v596, %v697
      %v707 = vmul.f32 %v607, %v697
      %v708 = vmul.f32 %v597, %v697
      %v709 = vmul.f32 %v608, %v697
      %v710 = vmul.f32 %v598, %v697
      %v711 = vmul.f32 %v609, %v697
      %v712 = vmul.f32 %v599, %v697
      %v713 = vmul.f32 %v610, %v697
      %v714 = vmul.f32 %v600, %v697
      %v715 = vadd.f32 %v675, %v699
      %v716 = vadd.f32 %v676, %v700
      %v717 = vadd.f32 %v677, %v701
      %v718 = vadd.f32 %v678, %v702
      %v719 = vadd.f32 %v679, %v703
      %v720 = vadd.f32 %v680, %v704
      %v721 = vadd.f32 %v681, %v705
      %v722 = vadd.f32 %v682, %v706
      %v723 = vadd.f32 %v683, %v707
      %v724 = vadd.f32 %v684, %v708
      %v725 = vadd.f32 %v685, %v709
      %v726 = vadd.f32 %v686, %v710
      %v727 = vadd.f32 %v687, %v711
      %v728 = vadd.f32 %v688, %v712
      %v729 = vadd.f32 %v689, %v713
      %v730 = vadd.f32 %v690, %v714
      %v731 = vrot.slane %v409, 2
      %v732 = vrot.slane %v412, 2
      %v733 = vrot.slane %v415, 2
      %v734 = vrot.slane %v418, 2
      %v735 = vrot.slane %v421, 2
      %v736 = vrot.slane %v424, 2
      %v737 = vrot.slane %v427, 2
      %v738 = vrot.slane %v430, 2
      %v739 = vrot.slane %v433, 2
      %v740 = vrot.slane %v436, 2
      %v741 = vrot.slane %v410, 2
      %v742 = vrot.slane %v413, 2
      %v743 = vrot.slane %v416, 2
      %v744 = vrot.slane %v419, 2
      %v745 = vrot.slane %v422, 2
      %v746 = vrot.slane %v425, 2
      %v747 = vrot.slane %v428, 2
      %v748 = vrot.slane %v431, 2
      %v749 = vrot.slane %v434, 2
      %v750 = vrot.slane %v437, 2
      %v751 = vrot.slane %v411, 2
      %v752 = vrot.slane %v414, 2
      %v753 = vrot.slane %v417, 2
      %v754 = vrot.slane %v420, 2
      %v755 = vrot.slane %v423, 2
      %v756 = vrot.slane %v426, 2
      %v757 = vrot.slane %v429, 2
      %v758 = vrot.slane %v432, 2
      %v759 = vrot.slane %v435, 2
      %v760 = vrot.slane %v438, 2
      %vm761 = vcmp.lt.s32.totalorder %v589, 6
      %v762 = vsel %vm761, %v741, %v751
      %v763 = vsel %vm761, %v742, %v752
      %v764 = vsel %vm761, %v743, %v753
      %v765 = vsel %vm761, %v744, %v754
      %v766 = vsel %vm761, %v745, %v755
      %v767 = vsel %vm761, %v746, %v756
      %v768 = vsel %vm761, %v747, %v757
      %v769 = vsel %vm761, %v748, %v758
      %v770 = vsel %vm761, %v749, %v759
      %v771 = vsel %vm761, %v750, %v760
      %v772 = vsel %vm761, %v731, %v741
      %v773 = vsel %vm761, %v732, %v742
      %v774 = vsel %vm761, %v733, %v743
      %v775 = vsel %vm761, %v734, %v744
      %v776 = vsel %vm761, %v735, %v745
      %v777 = vsel %vm761, %v736, %v746
      %v778 = vsel %vm761, %v737, %v747
      %v779 = vsel %vm761, %v738, %v748
      %v780 = vsel %vm761, %v739, %v749
      %v781 = vsel %vm761, %v740, %v750
      %s782 = scalar_lea.vmem %s2, 2
      %v783 = vld [vmem:[%s782] sm:$0x1]
      %v785 = vlaneseq
      %v786 = vshrl.u32 %v785, 7
      %v787 = vsub.s32 0, %v786
      %v788 = vrot.slane %v783, %v787
      %v790 = vmul.f32 %v772, %v788
      %v791 = vmul.f32 %v762, %v788
      %v792 = vmul.f32 %v773, %v788
      %v793 = vmul.f32 %v763, %v788
      %v794 = vmul.f32 %v774, %v788
      %v795 = vmul.f32 %v764, %v788
      %v796 = vmul.f32 %v775, %v788
      %v797 = vmul.f32 %v765, %v788
      %v798 = vmul.f32 %v776, %v788
      %v799 = vmul.f32 %v766, %v788
      %v800 = vmul.f32 %v777, %v788
      %v801 = vmul.f32 %v767, %v788
      %v802 = vmul.f32 %v778, %v788
      %v803 = vmul.f32 %v768, %v788
      %v804 = vmul.f32 %v779, %v788
      %v805 = vmul.f32 %v769, %v788
      %v806 = vadd.f32 %v715, %v790
      %v807 = vadd.f32 %v716, %v791
      %v808 = vadd.f32 %v717, %v792
      %v809 = vadd.f32 %v718, %v793
      %v810 = vadd.f32 %v719, %v794
      %v811 = vadd.f32 %v720, %v795
      %v812 = vadd.f32 %v721, %v796
      %v813 = vadd.f32 %v722, %v797
      %v814 = vadd.f32 %v723, %v798
      %v815 = vadd.f32 %v724, %v799
      %v816 = vadd.f32 %v725, %v800
      %v817 = vadd.f32 %v726, %v801
      %v818 = vadd.f32 %v727, %v802
      %v819 = vadd.f32 %v728, %v803
      %v820 = vadd.f32 %v729, %v804
      %v821 = vadd.f32 %v730, %v805
      %s822 = scalar_lea.vmem %s2, 5
      %v823 = vld [vmem:[%s822] sm:$0x1]
      %v825 = vlaneseq
      %v826 = vshrl.u32 %v825, 7
      %v827 = vsub.s32 0, %v826
      %v828 = vrot.slane %v823, %v827
      %v830 = vmul.f32 %v773, %v828
      %v831 = vmul.f32 %v763, %v828
      %v832 = vmul.f32 %v774, %v828
      %v833 = vmul.f32 %v764, %v828
      %v834 = vmul.f32 %v775, %v828
      %v835 = vmul.f32 %v765, %v828
      %v836 = vmul.f32 %v776, %v828
      %v837 = vmul.f32 %v766, %v828
      %v838 = vmul.f32 %v777, %v828
      %v839 = vmul.f32 %v767, %v828
      %v840 = vmul.f32 %v778, %v828
      %v841 = vmul.f32 %v768, %v828
      %v842 = vmul.f32 %v779, %v828
      %v843 = vmul.f32 %v769, %v828
      %v844 = vmul.f32 %v780, %v828
      %v845 = vmul.f32 %v770, %v828
      %v846 = vadd.f32 %v806, %v830
      %v847 = vadd.f32 %v807, %v831
      %v848 = vadd.f32 %v808, %v832
      %v849 = vadd.f32 %v809, %v833
      %v850 = vadd.f32 %v810, %v834
      %v851 = vadd.f32 %v811, %v835
      %v852 = vadd.f32 %v812, %v836
      %v853 = vadd.f32 %v813, %v837
      %v854 = vadd.f32 %v814, %v838
      %v855 = vadd.f32 %v815, %v839
      %v856 = vadd.f32 %v816, %v840
      %v857 = vadd.f32 %v817, %v841
      %v858 = vadd.f32 %v818, %v842
      %v859 = vadd.f32 %v819, %v843
      %v860 = vadd.f32 %v820, %v844
      %v861 = vadd.f32 %v821, %v845
      %s862 = scalar_lea.vmem %s2, 8
      %v863 = vld [vmem:[%s862] sm:$0x1]
      %v865 = vlaneseq
      %v866 = vshrl.u32 %v865, 7
      %v867 = vsub.s32 0, %v866
      %v868 = vrot.slane %v863, %v867
      %v870 = vmul.f32 %v774, %v868
      %v871 = vmul.f32 %v764, %v868
      %v872 = vmul.f32 %v775, %v868
      %v873 = vmul.f32 %v765, %v868
      %v874 = vmul.f32 %v776, %v868
      %v875 = vmul.f32 %v766, %v868
      %v876 = vmul.f32 %v777, %v868
      %v877 = vmul.f32 %v767, %v868
      %v878 = vmul.f32 %v778, %v868
      %v879 = vmul.f32 %v768, %v868
      %v880 = vmul.f32 %v779, %v868
      %v881 = vmul.f32 %v769, %v868
      %v882 = vmul.f32 %v780, %v868
      %v883 = vmul.f32 %v770, %v868
      %v884 = vmul.f32 %v781, %v868
      %v885 = vmul.f32 %v771, %v868
      %v886 = vadd.f32 %v846, %v870
      %v887 = vadd.f32 %v847, %v871
      %v888 = vadd.f32 %v848, %v872
      %v889 = vadd.f32 %v849, %v873
      %v890 = vadd.f32 %v850, %v874
      %v891 = vadd.f32 %v851, %v875
      %v892 = vadd.f32 %v852, %v876
      %v893 = vadd.f32 %v853, %v877
      %v894 = vadd.f32 %v854, %v878
      %v895 = vadd.f32 %v855, %v879
      %v896 = vadd.f32 %v856, %v880
      %v897 = vadd.f32 %v857, %v881
      %v898 = vadd.f32 %v858, %v882
      %v899 = vadd.f32 %v859, %v883
      %v900 = vadd.f32 %v860, %v884
      %v901 = vadd.f32 %v861, %v885
      %v902 = vld [vmem:[%s3] sm:$0xf]
      %v903 = vld [vmem:[%s4] sm:$0x1]
      %v905 = vlaneseq
      %v906 = vshrl.u32 %v905, 7
      %v907 = vsub.s32 0, %v906
      %v908 = vrot.slane %v903, %v907
      %v911 = vsel %vm371, %v886, 0
      %v914 = vsel %vm371, %v887, 0
      %v917 = vsel %vm371, %v888, 0
      %v920 = vsel %vm371, %v889, 0
      %v923 = vsel %vm371, %v890, 0
      %v926 = vsel %vm371, %v891, 0
      %v929 = vsel %vm371, %v892, 0
      %v932 = vsel %vm371, %v893, 0
      %v935 = vsel %vm371, %v894, 0
      %v938 = vsel %vm371, %v895, 0
      %v941 = vsel %vm371, %v896, 0
      %v944 = vsel %vm371, %v897, 0
      %v947 = vsel %vm371, %v898, 0
      %v950 = vsel %vm371, %v899, 0
      %v953 = vsel %vm371, %v900, 0
      %v956 = vsel %vm371, %v901, 0
      %vm958 = vcmask 1043456
      %v960 = vsel %vm958, %v902, 0
      %962 = vmatprep.subr.mxu0 0.0
      %963 = vmatpush1.msra.mxu0 %v960
      %964 = vmatprep.subr.mxu0 0.0
      %965 = vmatpush1.msra.mxu0 0.0
      %966 = vmatprep.subr.mxu0 0.0
      %967 = vmatpush1.msra.mxu0 0.0
      %968 = vmatprep.subr.mxu0 0.0
      %969 = vmatpush1.msra.mxu0 0.0
      %970 = vmatprep.subr.mxu0 0.0
      %971 = vmatpush1.msra.mxu0 0.0
      %972 = vmatprep.subr.mxu0 0.0
      %973 = vmatpush1.msra.mxu0 0.0
      %974 = vmatprep.subr.mxu0 0.0
      %975 = vmatpush1.msra.mxu0 0.0
      %976 = vmatprep.subr.mxu0 0.0
      %977 = vmatpush1.msra.mxu0 0.0
      %978 = vmatprep.subr.mxu0 0.0
      %979 = vmatpush1.msra.mxu0 0.0
      %980 = vmatprep.subr.mxu0 0.0
      %981 = vmatpush1.msra.mxu0 0.0
      %982 = vmatprep.subr.mxu0 0.0
      %983 = vmatpush1.msra.mxu0 0.0
      %984 = vmatprep.subr.mxu0 0.0
      %985 = vmatpush1.msra.mxu0 0.0
      %986 = vmatprep.subr.mxu0 0.0
      %987 = vmatpush1.msra.mxu0 0.0
      %988 = vmatprep.subr.mxu0 0.0
      %989 = vmatpush1.msra.mxu0 0.0
      %990 = vmatprep.subr.mxu0 0.0
      %991 = vmatpush1.msra.mxu0 0.0
      %992 = vmatprep.subr.mxu0 0.0
      %993 = vmatpush1.msra.mxu0 0.0
      %994 = vmatprep.subr.mxu0 0.0
      %995 = vmatpush1.msra.mxu0 0.0
      %996 = vmatprep.subr.mxu0 0.0
      %997 = vmatpush1.msra.mxu0 0.0
      %998 = vmatprep.subr.mxu0 0.0
      %999 = vmatpush1.msra.mxu0 0.0
      %1000 = vmatprep.subr.mxu0 0.0
      %1001 = vmatpush1.msra.mxu0 0.0
      %1002 = vmatprep.subr.mxu0 0.0
      %1003 = vmatpush1.msra.mxu0 0.0
      %1004 = vmatprep.subr.mxu0 0.0
      %1005 = vmatpush1.msra.mxu0 0.0
      %1006 = vmatprep.subr.mxu0 0.0
      %1007 = vmatpush1.msra.mxu0 0.0
      %1008 = vmatprep.subr.mxu0 0.0
      %1009 = vmatpush1.msra.mxu0 0.0
      %1010 = vmatprep.subr.mxu0 0.0
      %1011 = vmatpush1.msra.mxu0 0.0
      %1012 = vmatprep.subr.mxu0 0.0
      %1013 = vmatpush1.msra.mxu0 0.0
      %1014 = vmatprep.subr.mxu0 0.0
      %1015 = vmatpush1.msra.mxu0 0.0
      %1016 = vmatprep.subr.mxu0 0.0
      %1017 = vmatpush1.msra.mxu0 0.0
      %1018 = vmatprep.subr.mxu0 0.0
      %1019 = vmatpush1.msra.mxu0 0.0
      %1020 = vmatprep.subr.mxu0 0.0
      %1021 = vmatpush1.msra.mxu0 0.0
      %1022 = vmatprep.subr.mxu0 0.0
      %1023 = vmatpush1.msra.mxu0 0.0
      %1024 = vmatprep.subr.mxu0 0.0
      %1025 = vmatpush1.msra.mxu0 0.0
      %1026 = vmatprep.mubr.f32.mxu0 0.0
      %1027 = vmatmul.mubr.f32.gmra.mrb[0].mxu0 %v911
      %v1028 = vpop.f32.mrb[0].mxu0
      %v1029 = vadd.f32 %v908, %v1028
      %v1030 = vpop.f32.mrb[0].mxu0
      %1031 = vmatprep.mubr.f32.mxu0 0.0
      %1032 = vmatmul.mubr.f32.gmra.mrb[0].mxu0 %v914
      %v1033 = vpop.f32.mrb[0].mxu0
      %v1034 = vadd.f32 %v908, %v1033
      %v1035 = vpop.f32.mrb[0].mxu0
      %1036 = vmatprep.mubr.f32.mxu0 0.0
      %1037 = vmatmul.mubr.f32.gmra.mrb[0].mxu0 %v917
      %v1038 = vpop.f32.mrb[0].mxu0
      %v1039 = vadd.f32 %v908, %v1038
      %v1040 = vpop.f32.mrb[0].mxu0
      %1041 = vmatprep.mubr.f32.mxu0 0.0
      %1042 = vmatmul.mubr.f32.gmra.mrb[0].mxu0 %v920
      %v1043 = vpop.f32.mrb[0].mxu0
      %v1044 = vadd.f32 %v908, %v1043
      %v1045 = vpop.f32.mrb[0].mxu0
      %1046 = vmatprep.mubr.f32.mxu0 0.0
      %1047 = vmatmul.mubr.f32.gmra.mrb[0].mxu0 %v923
      %v1048 = vpop.f32.mrb[0].mxu0
      %v1049 = vadd.f32 %v908, %v1048
      %v1050 = vpop.f32.mrb[0].mxu0
      %1051 = vmatprep.mubr.f32.mxu0 0.0
      %1052 = vmatmul.mubr.f32.gmra.mrb[0].mxu0 %v926
      %v1053 = vpop.f32.mrb[0].mxu0
      %v1054 = vadd.f32 %v908, %v1053
      %v1055 = vpop.f32.mrb[0].mxu0
      %1056 = vmatprep.mubr.f32.mxu0 0.0
      %1057 = vmatmul.mubr.f32.gmra.mrb[0].mxu0 %v929
      %v1058 = vpop.f32.mrb[0].mxu0
      %v1059 = vadd.f32 %v908, %v1058
      %v1060 = vpop.f32.mrb[0].mxu0
      %1061 = vmatprep.mubr.f32.mxu0 0.0
      %1062 = vmatmul.mubr.f32.gmra.mrb[0].mxu0 %v932
      %v1063 = vpop.f32.mrb[0].mxu0
      %v1064 = vadd.f32 %v908, %v1063
      %v1065 = vpop.f32.mrb[0].mxu0
      %1066 = vmatprep.mubr.f32.mxu0 0.0
      %1067 = vmatmul.mubr.f32.gmra.mrb[0].mxu0 %v935
      %v1068 = vpop.f32.mrb[0].mxu0
      %v1069 = vadd.f32 %v908, %v1068
      %v1070 = vpop.f32.mrb[0].mxu0
      %1071 = vmatprep.mubr.f32.mxu0 0.0
      %1072 = vmatmul.mubr.f32.gmra.mrb[0].mxu0 %v938
      %v1073 = vpop.f32.mrb[0].mxu0
      %v1074 = vadd.f32 %v908, %v1073
      %v1075 = vpop.f32.mrb[0].mxu0
      %1076 = vmatprep.mubr.f32.mxu0 0.0
      %1077 = vmatmul.mubr.f32.gmra.mrb[0].mxu0 %v941
      %v1078 = vpop.f32.mrb[0].mxu0
      %v1079 = vadd.f32 %v908, %v1078
      %v1080 = vpop.f32.mrb[0].mxu0
      %1081 = vmatprep.mubr.f32.mxu0 0.0
      %1082 = vmatmul.mubr.f32.gmra.mrb[0].mxu0 %v944
      %v1083 = vpop.f32.mrb[0].mxu0
      %v1084 = vadd.f32 %v908, %v1083
      %v1085 = vpop.f32.mrb[0].mxu0
      %1086 = vmatprep.mubr.f32.mxu0 0.0
      %1087 = vmatmul.mubr.f32.gmra.mrb[0].mxu0 %v947
      %v1088 = vpop.f32.mrb[0].mxu0
      %v1089 = vadd.f32 %v908, %v1088
      %v1090 = vpop.f32.mrb[0].mxu0
      %1091 = vmatprep.mubr.f32.mxu0 0.0
      %1092 = vmatmul.mubr.f32.gmra.mrb[0].mxu0 %v950
      %v1093 = vpop.f32.mrb[0].mxu0
      %v1094 = vadd.f32 %v908, %v1093
      %v1095 = vpop.f32.mrb[0].mxu0
      %1096 = vmatprep.mubr.f32.mxu0 0.0
      %1097 = vmatmul.mubr.f32.gmra.mrb[0].mxu0 %v953
      %v1098 = vpop.f32.mrb[0].mxu0
      %v1099 = vadd.f32 %v908, %v1098
      %v1100 = vpop.f32.mrb[0].mxu0
      %1101 = vmatprep.mubr.f32.mxu0 0.0
      %1102 = vmatmul.mubr.f32.gmra.mrb[0].mxu0 %v956
      %v1103 = vpop.f32.mrb[0].mxu0
      %v1104 = vadd.f32 %v908, %v1103
      %v1105 = vpop.f32.mrb[0].mxu0
      %1106 = vdwg.mxu0
      %vm1107 = vcmask 64512
      %1108 = vst.msk [vmem:[%s345] sm:$0xff] %vm1107, %v1029
      %1109 = vst.msk [vmem:[%s345 + $0x8] sm:$0xff] %vm1107, %v1034
      %1110 = vst.msk [vmem:[%s345 + $0x10] sm:$0xff] %vm1107, %v1039
      %1111 = vst.msk [vmem:[%s345 + $0x18] sm:$0xff] %vm1107, %v1044
      %1112 = vst.msk [vmem:[%s345 + $0x20] sm:$0xff] %vm1107, %v1049
      %1113 = vst.msk [vmem:[%s345 + $0x28] sm:$0xff] %vm1107, %v1054
      %1114 = vst.msk [vmem:[%s345 + $0x30] sm:$0xff] %vm1107, %v1059
      %1115 = vst.msk [vmem:[%s345 + $0x38] sm:$0xff] %vm1107, %v1064
      %1116 = vst.msk [vmem:[%s345 + $0x40] sm:$0xff] %vm1107, %v1069
      %1117 = vst.msk [vmem:[%s345 + $0x48] sm:$0xff] %vm1107, %v1074
      %1118 = vst.msk [vmem:[%s345 + $0x50] sm:$0xff] %vm1107, %v1079
      %1119 = vst.msk [vmem:[%s345 + $0x58] sm:$0xff] %vm1107, %v1084
      %1120 = vst.msk [vmem:[%s345 + $0x60] sm:$0xff] %vm1107, %v1089
      %1121 = vst.msk [vmem:[%s345 + $0x68] sm:$0xff] %vm1107, %v1094
      %1122 = vst.msk [vmem:[%s345 + $0x70] sm:$0xff] %vm1107, %v1099
      %1123 = vst.msk [vmem:[%s345 + $0x78] sm:$0xff] %vm1107, %v1104
      %s1124 = smul.u32 8, %s21
      %p1125 = scmp.lt.s32.totalorder %s20, 1
      %s1126 = scalar_select %p1125, %s20, 1
      %p1127 = scmp.lt.s32.totalorder %s1124, 15
      %s1128 = scalar_select %p1127, %s1124, 15
      %s1129 = smul.addr %s1128, 2
      %s1130 = smul.addr %s1126, 32
      %s1131 = sadd.s32 %s1129, %s1130
      %s1132 = smul.addr %s1131, 8
      %s1133 = scalar_lea.vmem %s5, %s1132
      // Predicated region
      $region41: #{tpu_custom_call.1} parent=39 // pred_check
        %p1134 = pneg %p171
      $region42: #{tpu_custom_call.1} parent=39 // pred_check_branch
        %1136 = sbr.rel (%p1134) target = $region44
      $region43: #{tpu_custom_call.1} parent=39 // pred_region
        %s1137 = smul.u32 8, %s21
      $region44: #{tpu_custom_call.1} parent=39 // pred_fallthru
        _
    $region40: #{tpu_custom_call.1} parent=5 // pred_fallthru
      _
    %p1138 = scmp.le.s32.totalorder 2, %s11
    // Predicated region
    $region45: #{tpu_custom_call.1} parent=5 // pred_check
      %p1139 = pneg %p1138
    $region46: #{tpu_custom_call.1} parent=5 // pred_check_branch
      %1141 = sbr.rel (%p1139) target = $region48
    $region47: #{tpu_custom_call.1} parent=5 // pred_region
      %s1142 = ssub.s32 %s11, 2
      // Predicated region
      $region49: #{tpu_custom_call.1} parent=47 // pred_check
        %p1143 = pneg %p177
      $region50: #{tpu_custom_call.1} parent=47 // pred_check_branch
        %1145 = sbr.rel (%p1143) target = $region52
      $region51: #{tpu_custom_call.1} parent=47 // pred_region
        %s1146 = smul.u32 8, %s23
        %p1147 = scmp.lt.s32.totalorder %s22, 1
        %s1148 = scalar_select %p1147, %s22, 1
        %p1149 = scmp.lt.s32.totalorder %s1146, 15
        %s1150 = scalar_select %p1149, %s1146, 15
        %s1151 = smul.addr %s1150, 2
        %s1152 = smul.addr %s1148, 32
        %s1153 = sadd.s32 %s1151, %s1152
        %s1154 = smul.addr %s1153, 8
        %s1155 = scalar_lea.vmem %s5, %s1154
      $region52: #{tpu_custom_call.1} parent=47 // pred_fallthru
        _
    $region48: #{tpu_custom_call.1} parent=5 // pred_fallthru
      _
  $region6: #{tpu_custom_call.1} parent=0 // loop_footer
    %s15 = sadd.s32 1, %s11
  $region7: #{tpu_custom_call.1} parent=0 // loop_footer_branch
    %10 = sbr.rel target = $region3
  $region8: #{tpu_custom_call.1} parent=0 // loop_exit
    _

</llo_original>
